<compile_context>
chip_gen: v7x
topology: tpu7x:2x2x1
jax: 0.10.0
libtpu: 0.0.40
codegen_flags: <defaults>
</compile_context>

<pallas_src>
import functools

import jax
import jax.numpy as jnp
from jax.experimental import pallas as pl
from jax.experimental.pallas import tpu as pltpu


def _round_up(x, m):
    return (x + m - 1) // m * m


def _cdiv(a, b):
    return -(-a // b)


def _device_budgets():
    """(streamed-tile budget, scoped-vmem limit) per TPU generation.

    v5e/v6e have 128 MiB physical VMEM -> bigger streamed tiles and a higher
    scoped limit; v7x has 64 MiB physical -> conservative 8 MiB / 32 MiB.
    Falls back to the conservative pair if the query is unavailable.
    """
    try:
        vmem = pltpu.get_tpu_info().vmem_capacity_bytes
    except Exception:
        vmem = 64 << 20
    if vmem >= (128 << 20):          # v5e / v6e
        return 16 << 20, 64 << 20
    return 8 << 20, 32 << 20         # v7x (and unknown)


def _choose_tiles(R, L, stream_bpe, pack, tile_budget):
    """Pick (rb, lk): rows / lanes per streamed block.

    lk is sized first (long contiguous per-row DMA bursts, up to 32 slabs =
    4096 lanes); rb then fills the per-step streaming budget.  Neither lk nor
    rb has to divide L / R: the ragged lane tail is masked in-kernel and the
    ragged row tail only pollutes output rows that are sliced off.
    """
    LK_MAX_SLABS = 32                       # <= 4096 lanes per block
    RB_MAX = 512                            # rows per tile (sublane axis)

    lk = min(LK_MAX_SLABS, _cdiv(L, 128)) * 128

    budget_rows = max(pack, tile_budget // (lk * stream_bpe))
    rb = min(RB_MAX, budget_rows, _round_up(R, pack))
    rb = max(pack, rb // pack * pack)

    # Guarantee >= 2 row tiles when possible so the "parallel" row axis can be
    # sharded across v7x's two TensorCores (harmless on single-TC v5e/v6e).
    if R > pack and _cdiv(R, rb) < 2:
        rb = max(pack, _round_up(_cdiv(R, 2), pack))

    return rb, lk


def _block_partial_sums(x_ref, n_lanes):
    """Sum the first `n_lanes` lanes of the (rb, lk) block into (rb, 128) f32.

    One 128-lane slab at a time: live f32 temporaries stay at ~2 (rb, 128)
    slabs regardless of lk.  The possibly-partial last slab is lane-masked so
    out-of-bounds garbage never reaches the accumulator.
    """
    rb = x_ref.shape[0]
    n_full = n_lanes // 128
    rem = n_lanes % 128
    acc = None
    for j in range(n_full):
        v = x_ref[:, j * 128:(j + 1) * 128].astype(jnp.float32)
        acc = v if acc is None else acc + v
    if rem:
        lane = jax.lax.broadcasted_iota(jnp.int32, (rb, 128), 1)
        v = x_ref[:, n_full * 128:(n_full + 1) * 128].astype(jnp.float32)
        v = jnp.where(lane < rem, v, 0.0)
        acc = v if acc is None else acc + v
    return acc


def _block_masked_partial_sums(x_ref, m_ref, n_lanes, mask_is_binary):
    """Per-slab (x*m) sums and nonzero counts over the first `n_lanes` lanes."""
    rb = x_ref.shape[0]
    n_full = n_lanes // 128
    rem = n_lanes % 128
    n_slabs = n_full + (1 if rem else 0)
    s_acc = None
    c_acc = None
    for j in range(n_slabs):
        sl = slice(j * 128, (j + 1) * 128)
        m = m_ref[:, sl].astype(jnp.float32)
        xm = x_ref[:, sl].astype(jnp.float32) * m
        # Binary (bool-origin) masks: the count is the mask itself; skip the
        # compare and reuse the single f32 cast of m (saves VPU work on v7x).
        cnt = m if mask_is_binary else (m != 0.0).astype(jnp.float32)
        if rem and j == n_full:                    # ragged last slab
            lane = jax.lax.broadcasted_iota(jnp.int32, (rb, 128), 1)
            valid = lane < rem
            xm = jnp.where(valid, xm, 0.0)
            cnt = jnp.where(valid, cnt, 0.0)
        s_acc = xm if s_acc is None else s_acc + xm
        c_acc = cnt if c_acc is None else c_acc + cnt
    return s_acc, c_acc


def _lane_row_sums(acc):
    """(rb, 128) f32 -> (1, rb) row sums, landed lane-dense via one MXU dot.

    precision=HIGHEST keeps the f32 partial sums from being demoted to a
    single bf16 MXU pass.
    """
    ones_row = jnp.ones((1, acc.shape[1]), jnp.float32)
    return jax.lax.dot_general(
        ones_row, acc,
        dimension_numbers=(((1,), (1,)), ((), ())),
        preferred_element_type=jnp.float32,
        precision=jax.lax.Precision.HIGHEST)


def _gap_kernel(x_ref, o_ref, acc_ref, *, inv_l, tail_lanes):
    k = pl.program_id(1)
    nk = pl.num_programs(1)
    lk = x_ref.shape[1]

    @pl.when(k == 0)
    def _():
        acc_ref[...] = jnp.zeros_like(acc_ref)

    if tail_lanes == lk:                      # L % lk == 0: every block full
        acc_ref[...] += _block_partial_sums(x_ref, lk)
    else:
        @pl.when(k < nk - 1)
        def _():
            acc_ref[...] += _block_partial_sums(x_ref, lk)

        @pl.when(k == nk - 1)                 # ragged last block: mask tail
        def _():
            acc_ref[...] += _block_partial_sums(x_ref, tail_lanes)

    @pl.when(k == nk - 1)
    def _():
        rb = acc_ref.shape[0]
        row_sums = _lane_row_sums(acc_ref[...])           # (1, rb) lane-dense
        o_ref[...] = (row_sums * inv_l).reshape(1, 1, rb).astype(o_ref.dtype)


def _masked_gap_kernel(x_ref, m_ref, o_ref, sum_ref, cnt_ref, *,
                       tail_lanes, mask_is_binary):
    k = pl.program_id(1)
    nk = pl.num_programs(1)
    lk = x_ref.shape[1]

    @pl.when(k == 0)
    def _():
        sum_ref[...] = jnp.zeros_like(sum_ref)
        cnt_ref[...] = jnp.zeros_like(cnt_ref)

    def accumulate(n_lanes):
        s, c = _block_masked_partial_sums(x_ref, m_ref, n_lanes, mask_is_binary)
        sum_ref[...] += s
        cnt_ref[...] += c

    if tail_lanes == lk:
        accumulate(lk)
    else:
        @pl.when(k < nk - 1)
        def _():
            accumulate(lk)

        @pl.when(k == nk - 1)
        def _():
            accumulate(tail_lanes)

    @pl.when(k == nk - 1)
    def _():
        rb = sum_ref.shape[0]
        s = _lane_row_sums(sum_ref[...])                  # (1, rb)
        cnt = _lane_row_sums(cnt_ref[...])                # (1, rb)
        # Rows whose mask is all-zero divide by zero (inf/nan), matching the
        # PyTorch reference (x*m).sum(...) / m.count_nonzero(...).
        o_ref[...] = (s * pl.reciprocal(cnt, approx=False)
                      ).reshape(1, 1, rb).astype(o_ref.dtype)


@functools.partial(jax.jit, static_argnames=("keepdim",))
def global_avg_pool2d(x, mask=None, keepdim=False):
    """Pallas TPU implementation of GlobalAvgPool2d.forward with dim=(2, 3)."""
    N, C, H, W = x.shape
    R, L = N * C, H * W
    x2 = x.reshape(R, L)                    # row-major view; no HBM copy

    m2 = None
    mask_is_binary = False
    stream_bpe = x.dtype.itemsize
    if mask is not None:
        m2 = mask.reshape(R, L)
        if m2.dtype == jnp.bool_:
            m2 = m2.astype(jnp.int8)        # narrower DMA; 0/1 values preserved
            mask_is_binary = True
        stream_bpe += m2.dtype.itemsize

    tile_budget, vmem_limit = _device_budgets()
    pack = max(8, 32 // x.dtype.itemsize)   # sublane packing: 8/16/32
    rb, lk = _choose_tiles(R, L, stream_bpe, pack, tile_budget)

    n_row_tiles = _cdiv(R, rb)
    n_k = _cdiv(L, lk)
    tail_lanes = L - (n_k - 1) * lk         # valid lanes in the last k block
    grid = (n_row_tiles, n_k)

    in_spec = pl.BlockSpec((rb, lk), lambda i, k: (i, k))
    # Lane-dense output: one (1, 1, rb) block per row tile, written once on the
    # final reduction step; over-run rows are sliced off below.
    out_shape = jax.ShapeDtypeStruct((n_row_tiles, 1, rb), x.dtype)
    out_spec = pl.BlockSpec((1, 1, rb), lambda i, k: (i, 0, 0))
    cparams = pltpu.CompilerParams(
        dimension_semantics=("parallel", "arbitrary"),
        vmem_limit_bytes=vmem_limit,
    )

    if mask is None:
        res = pl.pallas_call(
            functools.partial(_gap_kernel, inv_l=1.0 / L, tail_lanes=tail_lanes),
            out_shape=out_shape,
            grid=grid,
            in_specs=[in_spec],
            out_specs=out_spec,
            scratch_shapes=[pltpu.VMEM((rb, 128), jnp.float32)],
            compiler_params=cparams,
        )(x2)
    else:
        res = pl.pallas_call(
            functools.partial(_masked_gap_kernel, tail_lanes=tail_lanes,
                              mask_is_binary=mask_is_binary),
            out_shape=out_shape,
            grid=grid,
            in_specs=[in_spec, in_spec],
            out_specs=out_spec,
            scratch_shapes=[pltpu.VMEM((rb, 128), jnp.float32),
                            pltpu.VMEM((rb, 128), jnp.float32)],
            compiler_params=cparams,
        )(x2, m2)

    out = res.reshape(n_row_tiles * rb)[:R].reshape(N, C)
    if keepdim:
        # TODO(synk): PyTorch's masked+keepdim path broadcasts (N,C,1,1)/(N,C)
        # into an (N,C,N,C) outer product (an upstream quirk); we return the
        # sensible (N, C, 1, 1) shape instead.
        out = out.reshape(N, C, 1, 1)
    return out


if __name__ == "__main__":
    key = jax.random.PRNGKey(0)
    kx, km = jax.random.split(key)

    N, C, H, W = 2, 4, 16, 16
    x = jax.random.normal(kx, (N, C, H, W), dtype=jnp.float32)

    # --- unmasked path: x.mean(dim=(2, 3)) ---
    out = global_avg_pool2d(x)
    jax.block_until_ready(out)
    ref = jnp.mean(x, axis=(2, 3))
    assert out.shape == (N, C)
    assert jnp.allclose(out, ref, atol=1e-5, rtol=1e-5)

    # --- masked path: (x*mask).sum(dim=(2,3)) / mask.count_nonzero(dim=(2,3)) ---
    mask = jax.random.bernoulli(km, p=0.5, shape=(N, C, H, W)).astype(jnp.float32)
    out_m = global_avg_pool2d(x, mask)
    jax.block_until_ready(out_m)
    ref_m = jnp.sum(x * mask, axis=(2, 3)) / jnp.sum(mask != 0, axis=(2, 3))
    assert out_m.shape == (N, C)
    assert jnp.allclose(out_m, ref_m, atol=1e-5, rtol=1e-5)

    # keepdim=True variant
    out_k = global_avg_pool2d(x, keepdim=True)
    jax.block_until_ready(out_k)
    assert out_k.shape == (N, C, 1, 1)
    assert jnp.allclose(out_k.reshape(N, C), ref, atol=1e-5, rtol=1e-5)

    # Unaligned shape (R=3, L=35): in-kernel lane-tail masking + row over-run.
    x_small = jax.random.normal(kx, (1, 3, 5, 7), dtype=jnp.float32)
    out_s = global_avg_pool2d(x_small)
    jax.block_until_ready(out_s)
    assert jnp.allclose(out_s, jnp.mean(x_small, axis=(2, 3)), atol=1e-5, rtol=1e-5)

    # Bool mask path (shipped as int8; binary count fast path).
    bmask = jax.random.bernoulli(km, p=0.5, shape=(1, 3, 5, 7))
    out_sm = global_avg_pool2d(x_small, bmask)
    jax.block_until_ready(out_sm)
    ref_sm = jnp.sum(x_small * bmask, axis=(2, 3)) / jnp.sum(bmask, axis=(2, 3))
    assert jnp.allclose(out_sm, ref_sm, atol=1e-5, rtol=1e-5)

    # Multi-step reduction with a ragged lane tail (L = 65*67 = 4355 > 4096).
    x_big = jax.random.normal(kx, (2, 3, 65, 67), dtype=jnp.float32)
    out_b = global_avg_pool2d(x_big)
    jax.block_until_ready(out_b)
    assert jnp.allclose(out_b, jnp.mean(x_big, axis=(2, 3)), atol=1e-5, rtol=1e-5)
    bmask_b = jax.random.bernoulli(km, p=0.5, shape=x_big.shape)
    out_bm = global_avg_pool2d(x_big, bmask_b)
    jax.block_until_ready(out_bm)
    ref_bm = jnp.sum(x_big * bmask_b, axis=(2, 3)) / jnp.sum(bmask_b, axis=(2, 3))
    assert jnp.allclose(out_bm, ref_bm, atol=1e-5, rtol=1e-5)

    # Enough rows for >= 2 row tiles (megacore split path).
    x_wide = jax.random.normal(kx, (2, 96, 16, 16), dtype=jnp.float32)
    out_w = global_avg_pool2d(x_wide)
    jax.block_until_ready(out_w)
    assert jnp.allclose(out_w, jnp.mean(x_wide, axis=(2, 3)), atol=1e-5, rtol=1e-5)

    # bf16 input (16-row sublane packing + per-slab f32 cast).
    x_bf = jax.random.normal(kx, (N, C, H, W), dtype=jnp.bfloat16)
    out_bf = global_avg_pool2d(x_bf)
    jax.block_until_ready(out_bf)
    ref_bf = jnp.mean(x_bf.astype(jnp.float32), axis=(2, 3))
    assert out_bf.dtype == jnp.bfloat16
    assert jnp.allclose(out_bf.astype(jnp.float32), ref_bf, atol=5e-3, rtol=5e-3)

    print("KERNEL_OK")
</pallas_src>

<mosaic_0001>
module attributes {stable_mosaic.version = 11 : i64} {
  func.func @_gap_kernel(%arg0: i32, %arg1: i32, %arg2: memref<8x256xf32, #tpu.memory_space<vmem>>, %arg3: memref<1x1x8xf32, #tpu.memory_space<vmem>>, %arg4: memref<8x128xf32, #tpu.memory_space<vmem>>) attributes {dimension_semantics = [#tpu.dimension_semantics<parallel>, #tpu.dimension_semantics<arbitrary>], iteration_bounds = array<i64: 1, 1>, scalar_prefetch = 0 : i64, scratch_operands = 1 : i64, tpu.core_type = #tpu.core_type<tc>, window_params = [{transform_indices = @transform_0, window_bounds = array<i64: 8, 256>}, {transform_indices = @transform_1, window_bounds = array<i64: 1, 1, 8>}]} {
    %c0_i32 = arith.constant 0 : i32
    %0 = arith.cmpi eq, %arg1, %c0_i32 : i32
    %1 = arith.extui %0 : i1 to i32
    %c0_i32_0 = arith.constant 0 : i32
    %2 = arith.cmpi ne, %1, %c0_i32_0 : i32
    scf.if %2 {
      %cst = arith.constant 0.000000e+00 : f32
      %12 = vector.broadcast %cst : f32 to vector<8x128xf32>
      %c0_9 = arith.constant 0 : index
      %c0_10 = arith.constant 0 : index
      %13 = vector.load %arg4[%c0_9, %c0_10] : memref<8x128xf32, #tpu.memory_space<vmem>>, vector<8x128xf32>
      tpu.vector_store %arg4[%c0_9, %c0_10], %12 {strides = array<i32>} : memref<8x128xf32, #tpu.memory_space<vmem>>, vector<8x128xf32>,
    } else {
    }
    %c0 = arith.constant 0 : index
    %c0_1 = arith.constant 0 : index
    %3 = vector.load %arg4[%c0, %c0_1] : memref<8x128xf32, #tpu.memory_space<vmem>>, vector<8x128xf32>
    %c0_2 = arith.constant 0 : index
    %c0_3 = arith.constant 0 : index
    %4 = vector.load %arg2[%c0_2, %c0_3] : memref<8x256xf32, #tpu.memory_space<vmem>>, vector<8x128xf32>
    %c0_4 = arith.constant 0 : index
    %c128 = arith.constant 128 : index
    %5 = vector.load %arg2[%c0_4, %c128] : memref<8x256xf32, #tpu.memory_space<vmem>>, vector<8x128xf32>
    %6 = arith.addf %4, %5 : vector<8x128xf32>
    %7 = arith.addf %3, %6 : vector<8x128xf32>
    %c0_5 = arith.constant 0 : index
    %c0_6 = arith.constant 0 : index
    %8 = vector.load %arg4[%c0_5, %c0_6] : memref<8x128xf32, #tpu.memory_space<vmem>>, vector<8x128xf32>
    tpu.vector_store %arg4[%c0_5, %c0_6], %7 {strides = array<i32>} : memref<8x128xf32, #tpu.memory_space<vmem>>, vector<8x128xf32>,
    %c0_i32_7 = arith.constant 0 : i32
    %9 = arith.cmpi eq, %arg1, %c0_i32_7 : i32
    %10 = arith.extui %9 : i1 to i32
    %c0_i32_8 = arith.constant 0 : i32
    %11 = arith.cmpi ne, %10, %c0_i32_8 : i32
    scf.if %11 {
      %c0_9 = arith.constant 0 : index
      %c0_10 = arith.constant 0 : index
      %12 = vector.load %arg4[%c0_9, %c0_10] : memref<8x128xf32, #tpu.memory_space<vmem>>, vector<8x128xf32>
      %cst = arith.constant 1.000000e+00 : f32
      %13 = vector.broadcast %cst : f32 to vector<1x128xf32>
      %cst_11 = arith.constant dense<0.000000e+00> : vector<1x8xf32>
      %14 = tpu.matmul %13, %12, %cst_11 {dimension_numbers = #tpu.dot_dimension_numbers<[1], [1], [0], [0], [0, 0, 1, 0], [], []>, precision = #tpu.contract_precision<fp32>} : vector<1x128xf32>, vector<8x128xf32>, vector<1x8xf32> -> vector<1x8xf32>
      %cst_12 = arith.constant 3.906250e-03 : f32
      %15 = vector.broadcast %cst_12 : f32 to vector<1x8xf32>
      %16 = arith.mulf %14, %15 : vector<1x8xf32>
      %17 = vector.shape_cast %16 : vector<1x8xf32> to vector<1x1x8xf32>
      %c0_13 = arith.constant 0 : index
      %c0_14 = arith.constant 0 : index
      %c0_15 = arith.constant 0 : index
      %18 = vector.load %arg3[%c0_13, %c0_14, %c0_15] : memref<1x1x8xf32, #tpu.memory_space<vmem>>, vector<1x1x8xf32>
      tpu.vector_store %arg3[%c0_13, %c0_14, %c0_15], %17 {strides = array<i32>} : memref<1x1x8xf32, #tpu.memory_space<vmem>>, vector<1x1x8xf32>,
    } else {
    }
    return
  }
  func.func @transform_0(%arg0: i32, %arg1: i32) -> (i32, i32) {
    %c0_i32 = arith.constant 0 : i32
    return %arg0, %arg1 : i32, i32
  }
  func.func @transform_1(%arg0: i32, %arg1: i32) -> (i32, i32, i32) {
    %c0_i32 = arith.constant 0 : i32
    %c0_i32_0 = arith.constant 0 : i32
    %c0_i32_1 = arith.constant 0 : i32
    return %arg0, %c0_i32, %c0_i32_0 : i32, i32, i32
  }
}

</mosaic_0001>

<llo_original>
// kernel: global_avg_pool2d.1
$region0: #{global_avg_pool2d.1}
  #allocation0 [shape = 'u32[]', space=smem, size = 0x4, offset = 0x4, fixed_abs, tag = 'smem constant byte address 0x4 - core index']
  #allocation1 [shape = 'u32[144,128]{1,0:T(1,128)}', space=vmem, size = 0x12000, scoped, tag = 'internal scratch']
  #allocation2 [shape = 'f32[8,128]{1,0:T(8,128)}', space=vmem, size = 0x1000, scoped, tag = 'scratch operand']
  %s0 = inlined_call_operand.vmem [shape: f32[8,256], index: 0, kind: input, shape index: {}]
  %s1 = inlined_call_operand.vmem [shape: f32[1,1,8], index: 1, kind: output, shape index: {}]
  %s2 = sld [smem:[#allocation0]]
  $region22: #{global_avg_pool2d.1} parent=0
    _
  %s4 = ssub.s32 1, %s2
  %s5 = scalar_select 0, %s4, %s2
  // Predicated region
  $region2: #{global_avg_pool2d.1} parent=0 // pred_check
    _
  $region3: #{global_avg_pool2d.1} parent=0 // pred_check_branch
    %7 = sbr.rel (0) target = $region5
  $region4: #{global_avg_pool2d.1} parent=0 // pred_region
    _
  $region5: #{global_avg_pool2d.1} parent=0 // pred_fallthru
    _
  %p8 = scmp.eq.s32.totalorder 0, 0
  // Predicated region
  $region6: #{global_avg_pool2d.1} parent=0 // pred_check
    %p9 = pneg %p8
  $region7: #{global_avg_pool2d.1} parent=0 // pred_check_branch
    %11 = sbr.rel (%p9) target = $region9
  $region8: #{global_avg_pool2d.1} parent=0 // pred_region
    %12 = vst [vmem:[#allocation2] sm:$0xff] 0.0
  $region9: #{global_avg_pool2d.1} parent=0 // pred_fallthru
    _
  %v13 = vld [vmem:[#allocation2] sm:$0xff]
  %v14 = vld [vmem:[%s0] sm:$0xff]
  %v15 = vld [vmem:[%s0 + $0x8] sm:$0xff]
  %v16 = vadd.f32 %v14, %v15
  %v17 = vadd.f32 %v13, %v16
  %18 = vst [vmem:[#allocation2] sm:$0xff] %v17
  // Predicated region
  $region10: #{global_avg_pool2d.1} parent=0 // pred_check
    %p19 = pneg %p8
  $region11: #{global_avg_pool2d.1} parent=0 // pred_check_branch
    %21 = sbr.rel (%p19) target = $region13
  $region12: #{global_avg_pool2d.1} parent=0 // pred_region
    %v22 = vld [vmem:[#allocation2] sm:$0xff]
    %23 = vmatprep.subr.mxu0 0.0
    %v24 = vand.u32 %v22, 4294901760
    %25 = vmatpush1.xpose.msra.mxu0 %v24
    %26 = vmatprep.subr.mxu0 0.0
    %27 = vmatpush1.xpose.msra.mxu0 0.0
    %28 = vmatprep.subr.mxu0 0.0
    %29 = vmatpush1.xpose.msra.mxu0 0.0
    %30 = vmatprep.subr.mxu0 0.0
    %31 = vmatpush1.xpose.msra.mxu0 0.0
    %32 = vmatprep.subr.mxu0 0.0
    %33 = vmatpush1.xpose.msra.mxu0 0.0
    %34 = vmatprep.subr.mxu0 0.0
    %35 = vmatpush1.xpose.msra.mxu0 0.0
    %36 = vmatprep.subr.mxu0 0.0
    %37 = vmatpush1.xpose.msra.mxu0 0.0
    %38 = vmatprep.subr.mxu0 0.0
    %39 = vmatpush1.xpose.msra.mxu0 0.0
    %40 = vmatprep.subr.mxu0 0.0
    %41 = vmatpush1.xpose.msra.mxu0 0.0
    %42 = vmatprep.subr.mxu0 0.0
    %43 = vmatpush1.xpose.msra.mxu0 0.0
    %44 = vmatprep.subr.mxu0 0.0
    %45 = vmatpush1.xpose.msra.mxu0 0.0
    %46 = vmatprep.subr.mxu0 0.0
    %47 = vmatpush1.xpose.msra.mxu0 0.0
    %48 = vmatprep.subr.mxu0 0.0
    %49 = vmatpush1.xpose.msra.mxu0 0.0
    %50 = vmatprep.subr.mxu0 0.0
    %51 = vmatpush1.xpose.msra.mxu0 0.0
    %52 = vmatprep.subr.mxu0 0.0
    %53 = vmatpush1.xpose.msra.mxu0 0.0
    %54 = vmatprep.subr.mxu0 0.0
    %55 = vmatpush1.xpose.msra.mxu0 0.0
    %56 = vmatprep.subr.mxu0 0.0
    %57 = vmatpush1.xpose.msra.mxu0 0.0
    %58 = vmatprep.subr.mxu0 0.0
    %59 = vmatpush1.xpose.msra.mxu0 0.0
    %60 = vmatprep.subr.mxu0 0.0
    %61 = vmatpush1.xpose.msra.mxu0 0.0
    %62 = vmatprep.subr.mxu0 0.0
    %63 = vmatpush1.xpose.msra.mxu0 0.0
    %64 = vmatprep.subr.mxu0 0.0
    %65 = vmatpush1.xpose.msra.mxu0 0.0
    %66 = vmatprep.subr.mxu0 0.0
    %67 = vmatpush1.xpose.msra.mxu0 0.0
    %68 = vmatprep.subr.mxu0 0.0
    %69 = vmatpush1.xpose.msra.mxu0 0.0
    %70 = vmatprep.subr.mxu0 0.0
    %71 = vmatpush1.xpose.msra.mxu0 0.0
    %72 = vmatprep.subr.mxu0 0.0
    %73 = vmatpush1.xpose.msra.mxu0 0.0
    %74 = vmatprep.subr.mxu0 0.0
    %75 = vmatpush1.xpose.msra.mxu0 0.0
    %76 = vmatprep.subr.mxu0 0.0
    %77 = vmatpush1.xpose.msra.mxu0 0.0
    %78 = vmatprep.subr.mxu0 0.0
    %79 = vmatpush1.xpose.msra.mxu0 0.0
    %80 = vmatprep.subr.mxu0 0.0
    %81 = vmatpush1.xpose.msra.mxu0 0.0
    %82 = vmatprep.subr.mxu0 0.0
    %83 = vmatpush1.xpose.msra.mxu0 0.0
    %84 = vmatprep.subr.mxu0 0.0
    %85 = vmatpush1.xpose.msra.mxu0 0.0
    %86 = vmatprep.subr.mxu0 0.0
    %87 = vmatpush1.xpose.msra.mxu0 0.0
    %88 = vmatprep.mubr.f32.mxu0 0.0
    %89 = vmatmul.mubr.f32.gmra.mrb[0].mxu0 0.0
    %v90 = vpop.f32.mrb[0].mxu0
    %v91 = vadd.f32 0.0, %v90
    %v92 = vpop.f32.mrb[0].mxu0
    %93 = vdwg.mxu0
    %94 = vmatprep.subr.mxu0 0.0
    %v95 = vand.u32 %v22, 4294901760
    %v96 = vsub.f32 %v22, %v95
    %v97 = vand.u32 %v96, 4294901760
    %v98 = vsub.f32 %v96, %v97
    %v99 = vand.u32 %v98, 4294901760
    %100 = vmatpush1.xpose.msra.mxu0 %v99
    %101 = vmatprep.subr.mxu0 0.0
    %102 = vmatpush1.xpose.msra.mxu0 0.0
    %103 = vmatprep.subr.mxu0 0.0
    %104 = vmatpush1.xpose.msra.mxu0 0.0
    %105 = vmatprep.subr.mxu0 0.0
    %106 = vmatpush1.xpose.msra.mxu0 0.0
    %107 = vmatprep.subr.mxu0 0.0
    %108 = vmatpush1.xpose.msra.mxu0 0.0
    %109 = vmatprep.subr.mxu0 0.0
    %110 = vmatpush1.xpose.msra.mxu0 0.0
    %111 = vmatprep.subr.mxu0 0.0
    %112 = vmatpush1.xpose.msra.mxu0 0.0
    %113 = vmatprep.subr.mxu0 0.0
    %114 = vmatpush1.xpose.msra.mxu0 0.0
    %115 = vmatprep.subr.mxu0 0.0
    %116 = vmatpush1.xpose.msra.mxu0 0.0
    %117 = vmatprep.subr.mxu0 0.0
    %118 = vmatpush1.xpose.msra.mxu0 0.0
    %119 = vmatprep.subr.mxu0 0.0
    %120 = vmatpush1.xpose.msra.mxu0 0.0
    %121 = vmatprep.subr.mxu0 0.0
    %122 = vmatpush1.xpose.msra.mxu0 0.0
    %123 = vmatprep.subr.mxu0 0.0
    %124 = vmatpush1.xpose.msra.mxu0 0.0
    %125 = vmatprep.subr.mxu0 0.0
    %126 = vmatpush1.xpose.msra.mxu0 0.0
    %127 = vmatprep.subr.mxu0 0.0
    %128 = vmatpush1.xpose.msra.mxu0 0.0
    %129 = vmatprep.subr.mxu0 0.0
    %130 = vmatpush1.xpose.msra.mxu0 0.0
    %131 = vmatprep.subr.mxu0 0.0
    %132 = vmatpush1.xpose.msra.mxu0 0.0
    %133 = vmatprep.subr.mxu0 0.0
    %134 = vmatpush1.xpose.msra.mxu0 0.0
    %135 = vmatprep.subr.mxu0 0.0
    %136 = vmatpush1.xpose.msra.mxu0 0.0
    %137 = vmatprep.subr.mxu0 0.0
    %138 = vmatpush1.xpose.msra.mxu0 0.0
    %139 = vmatprep.subr.mxu0 0.0
    %140 = vmatpush1.xpose.msra.mxu0 0.0
    %141 = vmatprep.subr.mxu0 0.0
    %142 = vmatpush1.xpose.msra.mxu0 0.0
    %143 = vmatprep.subr.mxu0 0.0
    %144 = vmatpush1.xpose.msra.mxu0 0.0
    %145 = vmatprep.subr.mxu0 0.0
    %146 = vmatpush1.xpose.msra.mxu0 0.0
    %147 = vmatprep.subr.mxu0 0.0
    %148 = vmatpush1.xpose.msra.mxu0 0.0
    %149 = vmatprep.subr.mxu0 0.0
    %150 = vmatpush1.xpose.msra.mxu0 0.0
    %151 = vmatprep.subr.mxu0 0.0
    %152 = vmatpush1.xpose.msra.mxu0 0.0
    %153 = vmatprep.subr.mxu0 0.0
    %154 = vmatpush1.xpose.msra.mxu0 0.0
    %155 = vmatprep.subr.mxu0 0.0
    %156 = vmatpush1.xpose.msra.mxu0 0.0
    %157 = vmatprep.subr.mxu0 0.0
    %158 = vmatpush1.xpose.msra.mxu0 0.0
    %159 = vmatprep.subr.mxu0 0.0
    %160 = vmatpush1.xpose.msra.mxu0 0.0
    %161 = vmatprep.subr.mxu0 0.0
    %162 = vmatpush1.xpose.msra.mxu0 0.0
    %163 = vmatprep.mubr.f32.mxu0 0.0
    %164 = vmatmul.mubr.f32.gmra.mrb[0].mxu0 1.0
    %v165 = vpop.f32.mrb[0].mxu0
    %v166 = vadd.f32 %v91, %v165
    %v167 = vpop.f32.mrb[0].mxu0
    %168 = vdwg.mxu0
    %169 = vmatprep.subr.mxu0 0.0
    %v170 = vand.u32 %v22, 4294901760
    %v171 = vsub.f32 %v22, %v170
    %172 = vmatpush1.xpose.msra.mxu0 %v171
    %173 = vmatprep.subr.mxu0 0.0
    %174 = vmatpush1.xpose.msra.mxu0 0.0
    %175 = vmatprep.subr.mxu0 0.0
    %176 = vmatpush1.xpose.msra.mxu0 0.0
    %177 = vmatprep.subr.mxu0 0.0
    %178 = vmatpush1.xpose.msra.mxu0 0.0
    %179 = vmatprep.subr.mxu0 0.0
    %180 = vmatpush1.xpose.msra.mxu0 0.0
    %181 = vmatprep.subr.mxu0 0.0
    %182 = vmatpush1.xpose.msra.mxu0 0.0
    %183 = vmatprep.subr.mxu0 0.0
    %184 = vmatpush1.xpose.msra.mxu0 0.0
    %185 = vmatprep.subr.mxu0 0.0
    %186 = vmatpush1.xpose.msra.mxu0 0.0
    %187 = vmatprep.subr.mxu0 0.0
    %188 = vmatpush1.xpose.msra.mxu0 0.0
    %189 = vmatprep.subr.mxu0 0.0
    %190 = vmatpush1.xpose.msra.mxu0 0.0
    %191 = vmatprep.subr.mxu0 0.0
    %192 = vmatpush1.xpose.msra.mxu0 0.0
    %193 = vmatprep.subr.mxu0 0.0
    %194 = vmatpush1.xpose.msra.mxu0 0.0
    %195 = vmatprep.subr.mxu0 0.0
    %196 = vmatpush1.xpose.msra.mxu0 0.0
    %197 = vmatprep.subr.mxu0 0.0
    %198 = vmatpush1.xpose.msra.mxu0 0.0
    %199 = vmatprep.subr.mxu0 0.0
    %200 = vmatpush1.xpose.msra.mxu0 0.0
    %201 = vmatprep.subr.mxu0 0.0
    %202 = vmatpush1.xpose.msra.mxu0 0.0
    %203 = vmatprep.subr.mxu0 0.0
    %204 = vmatpush1.xpose.msra.mxu0 0.0
    %205 = vmatprep.subr.mxu0 0.0
    %206 = vmatpush1.xpose.msra.mxu0 0.0
    %207 = vmatprep.subr.mxu0 0.0
    %208 = vmatpush1.xpose.msra.mxu0 0.0
    %209 = vmatprep.subr.mxu0 0.0
    %210 = vmatpush1.xpose.msra.mxu0 0.0
    %211 = vmatprep.subr.mxu0 0.0
    %212 = vmatpush1.xpose.msra.mxu0 0.0
    %213 = vmatprep.subr.mxu0 0.0
    %214 = vmatpush1.xpose.msra.mxu0 0.0
    %215 = vmatprep.subr.mxu0 0.0
    %216 = vmatpush1.xpose.msra.mxu0 0.0
    %217 = vmatprep.subr.mxu0 0.0
    %218 = vmatpush1.xpose.msra.mxu0 0.0
    %219 = vmatprep.subr.mxu0 0.0
    %220 = vmatpush1.xpose.msra.mxu0 0.0
    %221 = vmatprep.subr.mxu0 0.0
    %222 = vmatpush1.xpose.msra.mxu0 0.0
    %223 = vmatprep.subr.mxu0 0.0
    %224 = vmatpush1.xpose.msra.mxu0 0.0
    %225 = vmatprep.subr.mxu0 0.0
    %226 = vmatpush1.xpose.msra.mxu0 0.0
    %227 = vmatprep.subr.mxu0 0.0
    %228 = vmatpush1.xpose.msra.mxu0 0.0
    %229 = vmatprep.subr.mxu0 0.0
    %230 = vmatpush1.xpose.msra.mxu0 0.0
    %231 = vmatprep.subr.mxu0 0.0
    %232 = vmatpush1.xpose.msra.mxu0 0.0
    %233 = vmatprep.subr.mxu0 0.0
    %234 = vmatpush1.xpose.msra.mxu0 0.0
    %235 = vmatprep.mubr.f32.mxu0 0.0
    %236 = vmatmul.mubr.f32.gmra.mrb[0].mxu0 0.0
    %v237 = vpop.f32.mrb[0].mxu0
    %v238 = vadd.f32 %v166, %v237
    %v239 = vpop.f32.mrb[0].mxu0
    %240 = vdwg.mxu0
    %241 = vmatprep.subr.mxu0 0.0
    %v242 = vand.u32 %v22, 4294901760
    %243 = vmatpush1.xpose.msra.mxu0 %v242
    %244 = vmatprep.subr.mxu0 0.0
    %245 = vmatpush1.xpose.msra.mxu0 0.0
    %246 = vmatprep.subr.mxu0 0.0
    %247 = vmatpush1.xpose.msra.mxu0 0.0
    %248 = vmatprep.subr.mxu0 0.0
    %249 = vmatpush1.xpose.msra.mxu0 0.0
    %250 = vmatprep.subr.mxu0 0.0
    %251 = vmatpush1.xpose.msra.mxu0 0.0
    %252 = vmatprep.subr.mxu0 0.0
    %253 = vmatpush1.xpose.msra.mxu0 0.0
    %254 = vmatprep.subr.mxu0 0.0
    %255 = vmatpush1.xpose.msra.mxu0 0.0
    %256 = vmatprep.subr.mxu0 0.0
    %257 = vmatpush1.xpose.msra.mxu0 0.0
    %258 = vmatprep.subr.mxu0 0.0
    %259 = vmatpush1.xpose.msra.mxu0 0.0
    %260 = vmatprep.subr.mxu0 0.0
    %261 = vmatpush1.xpose.msra.mxu0 0.0
    %262 = vmatprep.subr.mxu0 0.0
    %263 = vmatpush1.xpose.msra.mxu0 0.0
    %264 = vmatprep.subr.mxu0 0.0
    %265 = vmatpush1.xpose.msra.mxu0 0.0
    %266 = vmatprep.subr.mxu0 0.0
    %267 = vmatpush1.xpose.msra.mxu0 0.0
    %268 = vmatprep.subr.mxu0 0.0
    %269 = vmatpush1.xpose.msra.mxu0 0.0
    %270 = vmatprep.subr.mxu0 0.0
    %271 = vmatpush1.xpose.msra.mxu0 0.0
    %272 = vmatprep.subr.mxu0 0.0
    %273 = vmatpush1.xpose.msra.mxu0 0.0
    %274 = vmatprep.subr.mxu0 0.0
    %275 = vmatpush1.xpose.msra.mxu0 0.0
    %276 = vmatprep.subr.mxu0 0.0
    %277 = vmatpush1.xpose.msra.mxu0 0.0
    %278 = vmatprep.subr.mxu0 0.0
    %279 = vmatpush1.xpose.msra.mxu0 0.0
    %280 = vmatprep.subr.mxu0 0.0
    %281 = vmatpush1.xpose.msra.mxu0 0.0
    %282 = vmatprep.subr.mxu0 0.0
    %283 = vmatpush1.xpose.msra.mxu0 0.0
    %284 = vmatprep.subr.mxu0 0.0
    %285 = vmatpush1.xpose.msra.mxu0 0.0
    %286 = vmatprep.subr.mxu0 0.0
    %287 = vmatpush1.xpose.msra.mxu0 0.0
    %288 = vmatprep.subr.mxu0 0.0
    %289 = vmatpush1.xpose.msra.mxu0 0.0
    %290 = vmatprep.subr.mxu0 0.0
    %291 = vmatpush1.xpose.msra.mxu0 0.0
    %292 = vmatprep.subr.mxu0 0.0
    %293 = vmatpush1.xpose.msra.mxu0 0.0
    %294 = vmatprep.subr.mxu0 0.0
    %295 = vmatpush1.xpose.msra.mxu0 0.0
    %296 = vmatprep.subr.mxu0 0.0
    %297 = vmatpush1.xpose.msra.mxu0 0.0
    %298 = vmatprep.subr.mxu0 0.0
    %299 = vmatpush1.xpose.msra.mxu0 0.0
    %300 = vmatprep.subr.mxu0 0.0
    %301 = vmatpush1.xpose.msra.mxu0 0.0
    %302 = vmatprep.subr.mxu0 0.0
    %303 = vmatpush1.xpose.msra.mxu0 0.0
    %304 = vmatprep.subr.mxu0 0.0
    %305 = vmatpush1.xpose.msra.mxu0 0.0
    %306 = vmatprep.mubr.f32.mxu0 0.0
    %307 = vmatmul.mubr.f32.gmra.mrb[0].mxu0 0.0
    %v308 = vpop.f32.mrb[0].mxu0
    %v309 = vadd.f32 %v238, %v308
    %v310 = vpop.f32.mrb[0].mxu0
    %311 = vdwg.mxu0
    %312 = vmatprep.subr.mxu0 0.0
    %v313 = vand.u32 %v22, 4294901760
    %v314 = vsub.f32 %v22, %v313
    %v315 = vand.u32 %v314, 4294901760
    %316 = vmatpush1.xpose.msra.mxu0 %v315
    %317 = vmatprep.subr.mxu0 0.0
    %318 = vmatpush1.xpose.msra.mxu0 0.0
    %319 = vmatprep.subr.mxu0 0.0
    %320 = vmatpush1.xpose.msra.mxu0 0.0
    %321 = vmatprep.subr.mxu0 0.0
    %322 = vmatpush1.xpose.msra.mxu0 0.0
    %323 = vmatprep.subr.mxu0 0.0
    %324 = vmatpush1.xpose.msra.mxu0 0.0
    %325 = vmatprep.subr.mxu0 0.0
    %326 = vmatpush1.xpose.msra.mxu0 0.0
    %327 = vmatprep.subr.mxu0 0.0
    %328 = vmatpush1.xpose.msra.mxu0 0.0
    %329 = vmatprep.subr.mxu0 0.0
    %330 = vmatpush1.xpose.msra.mxu0 0.0
    %331 = vmatprep.subr.mxu0 0.0
    %332 = vmatpush1.xpose.msra.mxu0 0.0
    %333 = vmatprep.subr.mxu0 0.0
    %334 = vmatpush1.xpose.msra.mxu0 0.0
    %335 = vmatprep.subr.mxu0 0.0
    %336 = vmatpush1.xpose.msra.mxu0 0.0
    %337 = vmatprep.subr.mxu0 0.0
    %338 = vmatpush1.xpose.msra.mxu0 0.0
    %339 = vmatprep.subr.mxu0 0.0
    %340 = vmatpush1.xpose.msra.mxu0 0.0
    %341 = vmatprep.subr.mxu0 0.0
    %342 = vmatpush1.xpose.msra.mxu0 0.0
    %343 = vmatprep.subr.mxu0 0.0
    %344 = vmatpush1.xpose.msra.mxu0 0.0
    %345 = vmatprep.subr.mxu0 0.0
    %346 = vmatpush1.xpose.msra.mxu0 0.0
    %347 = vmatprep.subr.mxu0 0.0
    %348 = vmatpush1.xpose.msra.mxu0 0.0
    %349 = vmatprep.subr.mxu0 0.0
    %350 = vmatpush1.xpose.msra.mxu0 0.0
    %351 = vmatprep.subr.mxu0 0.0
    %352 = vmatpush1.xpose.msra.mxu0 0.0
    %353 = vmatprep.subr.mxu0 0.0
    %354 = vmatpush1.xpose.msra.mxu0 0.0
    %355 = vmatprep.subr.mxu0 0.0
    %356 = vmatpush1.xpose.msra.mxu0 0.0
    %357 = vmatprep.subr.mxu0 0.0
    %358 = vmatpush1.xpose.msra.mxu0 0.0
    %359 = vmatprep.subr.mxu0 0.0
    %360 = vmatpush1.xpose.msra.mxu0 0.0
    %361 = vmatprep.subr.mxu0 0.0
    %362 = vmatpush1.xpose.msra.mxu0 0.0
    %363 = vmatprep.subr.mxu0 0.0
    %364 = vmatpush1.xpose.msra.mxu0 0.0
    %365 = vmatprep.subr.mxu0 0.0
    %366 = vmatpush1.xpose.msra.mxu0 0.0
    %367 = vmatprep.subr.mxu0 0.0
    %368 = vmatpush1.xpose.msra.mxu0 0.0
    %369 = vmatprep.subr.mxu0 0.0
    %370 = vmatpush1.xpose.msra.mxu0 0.0
    %371 = vmatprep.subr.mxu0 0.0
    %372 = vmatpush1.xpose.msra.mxu0 0.0
    %373 = vmatprep.subr.mxu0 0.0
    %374 = vmatpush1.xpose.msra.mxu0 0.0
    %375 = vmatprep.subr.mxu0 0.0
    %376 = vmatpush1.xpose.msra.mxu0 0.0
    %377 = vmatprep.subr.mxu0 0.0
    %378 = vmatpush1.xpose.msra.mxu0 0.0
    %379 = vmatprep.mubr.f32.mxu0 0.0
    %380 = vmatmul.mubr.f32.gmra.mrb[0].mxu0 1.0
    %v381 = vpop.f32.mrb[0].mxu0
    %v382 = vadd.f32 %v309, %v381
    %v383 = vpop.f32.mrb[0].mxu0
    %384 = vdwg.mxu0
    %385 = vmatprep.subr.mxu0 0.0
    %v386 = vand.u32 %v22, 4294901760
    %387 = vmatpush1.xpose.msra.mxu0 %v386
    %388 = vmatprep.subr.mxu0 0.0
    %389 = vmatpush1.xpose.msra.mxu0 0.0
    %390 = vmatprep.subr.mxu0 0.0
    %391 = vmatpush1.xpose.msra.mxu0 0.0
    %392 = vmatprep.subr.mxu0 0.0
    %393 = vmatpush1.xpose.msra.mxu0 0.0
    %394 = vmatprep.subr.mxu0 0.0
    %395 = vmatpush1.xpose.msra.mxu0 0.0
    %396 = vmatprep.subr.mxu0 0.0
    %397 = vmatpush1.xpose.msra.mxu0 0.0
    %398 = vmatprep.subr.mxu0 0.0
    %399 = vmatpush1.xpose.msra.mxu0 0.0
    %400 = vmatprep.subr.mxu0 0.0
    %401 = vmatpush1.xpose.msra.mxu0 0.0
    %402 = vmatprep.subr.mxu0 0.0
    %403 = vmatpush1.xpose.msra.mxu0 0.0
    %404 = vmatprep.subr.mxu0 0.0
    %405 = vmatpush1.xpose.msra.mxu0 0.0
    %406 = vmatprep.subr.mxu0 0.0
    %407 = vmatpush1.xpose.msra.mxu0 0.0
    %408 = vmatprep.subr.mxu0 0.0
    %409 = vmatpush1.xpose.msra.mxu0 0.0
    %410 = vmatprep.subr.mxu0 0.0
    %411 = vmatpush1.xpose.msra.mxu0 0.0
    %412 = vmatprep.subr.mxu0 0.0
    %413 = vmatpush1.xpose.msra.mxu0 0.0
    %414 = vmatprep.subr.mxu0 0.0
    %415 = vmatpush1.xpose.msra.mxu0 0.0
    %416 = vmatprep.subr.mxu0 0.0
    %417 = vmatpush1.xpose.msra.mxu0 0.0
    %418 = vmatprep.subr.mxu0 0.0
    %419 = vmatpush1.xpose.msra.mxu0 0.0
    %420 = vmatprep.subr.mxu0 0.0
    %421 = vmatpush1.xpose.msra.mxu0 0.0
    %422 = vmatprep.subr.mxu0 0.0
    %423 = vmatpush1.xpose.msra.mxu0 0.0
    %424 = vmatprep.subr.mxu0 0.0
    %425 = vmatpush1.xpose.msra.mxu0 0.0
    %426 = vmatprep.subr.mxu0 0.0
    %427 = vmatpush1.xpose.msra.mxu0 0.0
    %428 = vmatprep.subr.mxu0 0.0
    %429 = vmatpush1.xpose.msra.mxu0 0.0
    %430 = vmatprep.subr.mxu0 0.0
    %431 = vmatpush1.xpose.msra.mxu0 0.0
    %432 = vmatprep.subr.mxu0 0.0
    %433 = vmatpush1.xpose.msra.mxu0 0.0
    %434 = vmatprep.subr.mxu0 0.0
    %435 = vmatpush1.xpose.msra.mxu0 0.0
    %436 = vmatprep.subr.mxu0 0.0
    %437 = vmatpush1.xpose.msra.mxu0 0.0
    %438 = vmatprep.subr.mxu0 0.0
    %439 = vmatpush1.xpose.msra.mxu0 0.0
    %440 = vmatprep.subr.mxu0 0.0
    %441 = vmatpush1.xpose.msra.mxu0 0.0
    %442 = vmatprep.subr.mxu0 0.0
    %443 = vmatpush1.xpose.msra.mxu0 0.0
    %444 = vmatprep.subr.mxu0 0.0
    %445 = vmatpush1.xpose.msra.mxu0 0.0
    %446 = vmatprep.subr.mxu0 0.0
    %447 = vmatpush1.xpose.msra.mxu0 0.0
    %448 = vmatprep.subr.mxu0 0.0
    %449 = vmatpush1.xpose.msra.mxu0 0.0
    %450 = vmatprep.mubr.f32.mxu0 0.0
    %451 = vmatmul.mubr.f32.gmra.mrb[0].mxu0 1.0
    %v452 = vpop.f32.mrb[0].mxu0
    %v453 = vadd.f32 %v382, %v452
    %v454 = vpop.f32.mrb[0].mxu0
    %455 = vdwg.mxu0
    %v456 = vmul.f32 %v453, 0.00390625
    %vm457 = vcmask 57344
    %458 = vst.msk [vmem:[%s1] sm:$0x1] %vm457, %v456
  $region13: #{global_avg_pool2d.1} parent=0 // pred_fallthru
    _
  // Predicated region
  $region14: #{global_avg_pool2d.1} parent=0 // pred_check
    _
  $region15: #{global_avg_pool2d.1} parent=0 // pred_check_branch
    %460 = sbr.rel (0) target = $region17
  $region16: #{global_avg_pool2d.1} parent=0 // pred_region
    _
  $region17: #{global_avg_pool2d.1} parent=0 // pred_fallthru
    _
  // Predicated region
  $region18: #{global_avg_pool2d.1} parent=0 // pred_check
    _
  $region19: #{global_avg_pool2d.1} parent=0 // pred_check_branch
    %462 = sbr.rel (0) target = $region21
  $region20: #{global_avg_pool2d.1} parent=0 // pred_region
    _
  $region21: #{global_avg_pool2d.1} parent=0 // pred_fallthru
    _

</llo_original>
